<compile_context>
chip_gen: v7x
topology: tpu7x:2x2x1
jax: 0.10.0
libtpu: 0.0.40
codegen_flags: <defaults>
</compile_context>

<pallas_src>
import functools

import jax
import jax.numpy as jnp
from jax.experimental import pallas as pl
from jax.experimental.pallas import tpu as pltpu


def mha_kernel(x_ref,        # (B, K_in)      fused [user | item | 1 | 0-pad]
               w_ref,        # (K_in, 3*HHD)  block-diag Q|K|V weights, biases in ones-row
               s_ref,        # (HHD, HH)      segment-sum over D (scores)
               p_ref,        # (HH, HHD)      probability -> lane expansion
               gp_ref,       # (HH, HHD)      per-query-head denominator, lane-expanded
               wo_ref,       # (HHD, O_pad)   context-sum fused with out proj (lane padded)
               bo_ref,       # (1, O_pad)     output bias (lane padded)
               out_ref,      # (B, O_pad)
               *, hhd):
    x = x_ref[...]

    # Single fused projection: [q_rep | k_tile | v_tile], biases folded via the ones lane.
    qkv = jnp.dot(x, w_ref[...], preferred_element_type=jnp.float32)   # (B, 3*HHD)
    q = qkv[:, :hhd]                 # lane l = h*H*D + g*D + d -> q[b, h, d] / sqrt(D)
    k = qkv[:, hhd:2 * hhd]          # lane l                   -> k[b, g, d]
    v = qkv[:, 2 * hhd:]             # lane l                   -> v[b, g, d]

    # Scores: full-width VPU multiply + one MXU segment-sum over the D-lane groups.
    prod = q * k                                                            # (B, HHD)
    scores = jnp.dot(prod, s_ref[...], preferred_element_type=jnp.float32)  # (B, H*H)

    # Segmented softmax over key heads (global row max is a valid per-segment shift).
    m = jnp.max(scores, axis=-1, keepdims=True)
    e = jnp.exp(scores - m)

    # Two independent matmuls sharing LHS `e`; the reciprocal overlaps with the MXU.
    e_rep = jnp.dot(e, p_ref[...], preferred_element_type=jnp.float32)       # (B, HHD)
    denom_rep = jnp.dot(e, gp_ref[...], preferred_element_type=jnp.float32)  # (B, HHD)
    # Exact reciprocal (approx=True + NR step only if profiling shows it matters).
    ctx = e_rep * pl.reciprocal(denom_rep, approx=False) * v                 # (B, HHD)

    # Context segment-sum folded into the (lane-padded) output projection matmul.
    out_ref[...] = (jnp.dot(ctx, wo_ref[...], preferred_element_type=jnp.float32)
                    + bo_ref[...]).astype(out_ref.dtype)


def _pack_params(params, *, num_heads, embed_dim, k_in, o_pad):
    """Fold all head bookkeeping / biases into the (tiny) parameter matrices."""
    E = embed_dim
    H = num_heads
    D = E // H
    HH = H * H
    HHD = HH * D
    scale = 1.0 / (float(D) ** 0.5)

    lane = jnp.arange(HHD)
    q_cols = (lane // (H * D)) * D + (lane % D)        # lane -> q / ctx column (h*D + d)
    kv_cols = lane % E                                 # lane -> k / v column   (g*D + d)
    seg = (lane // (H * D)) * H + (lane // D) % H      # lane -> flat (h, g) segment index

    # Block-diagonal fused projection weight: rows [0,E) see user (Q, pre-scaled),
    # rows [E,2E) see item (K|V), row 2E is the ones-lane carrying all biases.
    w_proj = jnp.zeros((k_in, 3 * HHD), jnp.float32)
    w_proj = w_proj.at[:E, :HHD].set(params["wq"][:, q_cols] * scale)
    w_proj = w_proj.at[E:2 * E, HHD:2 * HHD].set(params["wk"][:, kv_cols])
    w_proj = w_proj.at[E:2 * E, 2 * HHD:].set(params["wv"][:, kv_cols])
    bias_row = jnp.concatenate([params["bq"][0, q_cols] * scale,
                                params["bk"][0, kv_cols],
                                params["bv"][0, kv_cols]])
    w_proj = w_proj.at[2 * E, :].set(bias_row)

    j = jnp.arange(HH)
    S = (lane[:, None] // D == j[None, :]).astype(jnp.float32)        # (HHD, HH)
    P = (j[:, None] == seg[None, :]).astype(jnp.float32)              # (HH, HHD)
    GP = (j[:, None] // H == seg[None, :] // H).astype(jnp.float32)   # (HH, HHD) = G @ P

    O = params["wo"].shape[1]
    wo_pad = jnp.zeros((HHD, o_pad), jnp.float32).at[:, :O].set(params["wo"][q_cols, :])
    bo_pad = jnp.zeros((1, o_pad), jnp.float32).at[:, :O].set(params["bo"])
    return w_proj, S, P, GP, wo_pad, bo_pad


def multi_head_attention(user_emb, item_emb, params, *, num_heads):
    B, E = user_emb.shape
    D = E // num_heads
    HH = num_heads * num_heads
    HHD = HH * D
    O = params["wo"].shape[1]

    # Keep the k|v split points and the output vreg-aligned (free slices / unmasked vst).
    assert HHD % 128 == 0, "HHD must be a multiple of 128 (vreg lane boundary)"
    k_in = ((2 * E + 1 + 127) // 128) * 128      # fused-input contraction dim, lane padded
    o_pad = ((O + 127) // 128) * 128             # lane-dense output width

    w_proj, S, P, GP, wo_pad, bo_pad = _pack_params(
        params, num_heads=num_heads, embed_dim=E, k_in=k_in, o_pad=o_pad)

    # Fused [user | item | 1 | 0-pad] input slab, built once in the wrapper.
    x = jnp.concatenate(
        [user_emb, item_emb,
         jnp.ones((B, 1), jnp.float32),
         jnp.zeros((B, k_in - 2 * E - 1), jnp.float32)], axis=1)

    vmem = pl.BlockSpec(memory_space=pltpu.MemorySpace.VMEM)
    kernel = functools.partial(mha_kernel, hhd=HHD)

    # TODO(synk): at much larger B, add a leading batch grid axis marked "parallel"
    # (v7x has 2 TensorCores) with 8-row-multiple blocks; at B=8 the gridless single
    # invocation is latency-optimal.
    # TODO(synk): the H-replicated weight packing grows as H*E^2; before scaling E/H,
    # block the projection weight over a grid axis and set vmem_limit_bytes (v7x has
    # only 64 MiB VMEM vs 128 MiB on v5e/v6e).
    out = pl.pallas_call(
        kernel,
        out_shape=jax.ShapeDtypeStruct((B, o_pad), jnp.float32),
        in_specs=[vmem] * 7,
        out_specs=vmem,
    )(x, w_proj, S, P, GP, wo_pad, bo_pad)
    return out[:, :O]


def reference(user_emb, item_emb, params, *, num_heads):
    B, E = user_emb.shape
    D = E // num_heads
    q = (user_emb @ params["wq"] + params["bq"]).reshape(B, num_heads, D)
    k = (item_emb @ params["wk"] + params["bk"]).reshape(B, num_heads, D)
    v = (item_emb @ params["wv"] + params["bv"]).reshape(B, num_heads, D)
    scores = jnp.einsum("bhd,bgd->bhg", q, k) / (D ** 0.5)
    w = jax.nn.softmax(scores, axis=-1)
    ctx = jnp.einsum("bhg,bgd->bhd", w, v).reshape(B, E)
    return ctx @ params["wo"] + params["bo"]


if __name__ == "__main__":
    B, E, H, O = 8, 32, 4, 16   # batch, embed_dim, num_heads, out_dim

    key = jax.random.PRNGKey(0)
    ks = jax.random.split(key, 10)
    params = {
        "wq": jax.random.normal(ks[0], (E, E), jnp.float32) * 0.1,
        "bq": jax.random.normal(ks[1], (1, E), jnp.float32) * 0.1,
        "wk": jax.random.normal(ks[2], (E, E), jnp.float32) * 0.1,
        "bk": jax.random.normal(ks[3], (1, E), jnp.float32) * 0.1,
        "wv": jax.random.normal(ks[4], (E, E), jnp.float32) * 0.1,
        "bv": jax.random.normal(ks[5], (1, E), jnp.float32) * 0.1,
        "wo": jax.random.normal(ks[6], (E, O), jnp.float32) * 0.1,
        "bo": jax.random.normal(ks[7], (1, O), jnp.float32) * 0.1,
    }
    user_emb = jax.random.normal(ks[8], (B, E), jnp.float32)
    item_emb = jax.random.normal(ks[9], (B, E), jnp.float32)

    out = multi_head_attention(user_emb, item_emb, params, num_heads=H)
    out = jax.block_until_ready(out)

    ref = reference(user_emb, item_emb, params, num_heads=H)
    assert out.shape == (B, O)
    assert jnp.allclose(out, ref, atol=1e-4, rtol=1e-4)

    print("KERNEL_OK")
</pallas_src>

<mosaic_0001>
module attributes {stable_mosaic.version = 11 : i64} {
  func.func @mha_kernel(%arg0: memref<8x128xf32, #tpu.memory_space<vmem>>, %arg1: memref<128x384xf32, #tpu.memory_space<vmem>>, %arg2: memref<128x16xf32, #tpu.memory_space<vmem>>, %arg3: memref<16x128xf32, #tpu.memory_space<vmem>>, %arg4: memref<16x128xf32, #tpu.memory_space<vmem>>, %arg5: memref<128x128xf32, #tpu.memory_space<vmem>>, %arg6: memref<1x128xf32, #tpu.memory_space<vmem>>, %arg7: memref<8x128xf32, #tpu.memory_space<vmem>>) attributes {dimension_semantics = [], scalar_prefetch = 0 : i64, scratch_operands = 0 : i64, tpu.core_type = #tpu.core_type<tc>} {
    %c0 = arith.constant 0 : index
    %c0_0 = arith.constant 0 : index
    %0 = vector.load %arg0[%c0, %c0_0] : memref<8x128xf32, #tpu.memory_space<vmem>>, vector<8x128xf32>
    %c0_1 = arith.constant 0 : index
    %c0_2 = arith.constant 0 : index
    %1 = vector.load %arg1[%c0_1, %c0_2] : memref<128x384xf32, #tpu.memory_space<vmem>>, vector<128x384xf32>
    %cst = arith.constant dense<0.000000e+00> : vector<8x384xf32>
    %2 = tpu.matmul %0, %1, %cst {dimension_numbers = #tpu.dot_dimension_numbers<[1], [0], [0], [1], [0, 0, 1, 1], [], []>} : vector<8x128xf32>, vector<128x384xf32>, vector<8x384xf32> -> vector<8x384xf32>
    %3 = vector.extract_strided_slice %2 {offsets = [0, 0], sizes = [8, 128], strides = [1, 1]} : vector<8x384xf32> to vector<8x128xf32>
    %4 = vector.extract_strided_slice %2 {offsets = [0, 128], sizes = [8, 128], strides = [1, 1]} : vector<8x384xf32> to vector<8x128xf32>
    %5 = vector.extract_strided_slice %2 {offsets = [0, 256], sizes = [8, 128], strides = [1, 1]} : vector<8x384xf32> to vector<8x128xf32>
    %6 = arith.mulf %3, %4 : vector<8x128xf32>
    %c0_3 = arith.constant 0 : index
    %c0_4 = arith.constant 0 : index
    %7 = vector.load %arg2[%c0_3, %c0_4] : memref<128x16xf32, #tpu.memory_space<vmem>>, vector<128x16xf32>
    %cst_5 = arith.constant dense<0.000000e+00> : vector<8x16xf32>
    %8 = tpu.matmul %6, %7, %cst_5 {dimension_numbers = #tpu.dot_dimension_numbers<[1], [0], [0], [1], [0, 0, 1, 1], [], []>} : vector<8x128xf32>, vector<128x16xf32>, vector<8x16xf32> -> vector<8x16xf32>
    %cst_6 = arith.constant dense<0xFF800000> : vector<8xf32>
    %9 = vector.multi_reduction <maximumf>, %8, %cst_6 [1] : vector<8x16xf32> to vector<8xf32>
    %10 = vector.shape_cast %9 : vector<8xf32> to vector<8x1xf32>
    %11 = vector.broadcast %10 : vector<8x1xf32> to vector<8x16xf32>
    %12 = arith.subf %8, %11 : vector<8x16xf32>
    %13 = math.exp %12 : vector<8x16xf32>
    %c0_7 = arith.constant 0 : index
    %c0_8 = arith.constant 0 : index
    %14 = vector.load %arg3[%c0_7, %c0_8] : memref<16x128xf32, #tpu.memory_space<vmem>>, vector<16x128xf32>
    %cst_9 = arith.constant dense<0.000000e+00> : vector<8x128xf32>
    %15 = tpu.matmul %13, %14, %cst_9 {dimension_numbers = #tpu.dot_dimension_numbers<[1], [0], [0], [1], [0, 0, 1, 1], [], []>} : vector<8x16xf32>, vector<16x128xf32>, vector<8x128xf32> -> vector<8x128xf32>
    %c0_10 = arith.constant 0 : index
    %c0_11 = arith.constant 0 : index
    %16 = vector.load %arg4[%c0_10, %c0_11] : memref<16x128xf32, #tpu.memory_space<vmem>>, vector<16x128xf32>
    %cst_12 = arith.constant dense<0.000000e+00> : vector<8x128xf32>
    %17 = tpu.matmul %13, %16, %cst_12 {dimension_numbers = #tpu.dot_dimension_numbers<[1], [0], [0], [1], [0, 0, 1, 1], [], []>} : vector<8x16xf32>, vector<16x128xf32>, vector<8x128xf32> -> vector<8x128xf32>
    %18 = tpu.reciprocal %17 : vector<8x128xf32> -> vector<8x128xf32>
    %19 = arith.mulf %15, %18 : vector<8x128xf32>
    %20 = arith.mulf %19, %5 : vector<8x128xf32>
    %c0_13 = arith.constant 0 : index
    %c0_14 = arith.constant 0 : index
    %21 = vector.load %arg5[%c0_13, %c0_14] : memref<128x128xf32, #tpu.memory_space<vmem>>, vector<128x128xf32>
    %cst_15 = arith.constant dense<0.000000e+00> : vector<8x128xf32>
    %22 = tpu.matmul %20, %21, %cst_15 {dimension_numbers = #tpu.dot_dimension_numbers<[1], [0], [0], [1], [0, 0, 1, 1], [], []>} : vector<8x128xf32>, vector<128x128xf32>, vector<8x128xf32> -> vector<8x128xf32>
    %c0_16 = arith.constant 0 : index
    %c0_17 = arith.constant 0 : index
    %23 = vector.load %arg6[%c0_16, %c0_17] : memref<1x128xf32, #tpu.memory_space<vmem>>, vector<1x128xf32>
    %24 = vector.broadcast %23 : vector<1x128xf32> to vector<8x128xf32>
    %25 = arith.addf %22, %24 : vector<8x128xf32>
    %c0_18 = arith.constant 0 : index
    %c0_19 = arith.constant 0 : index
    %26 = vector.load %arg7[%c0_18, %c0_19] : memref<8x128xf32, #tpu.memory_space<vmem>>, vector<8x128xf32>
    tpu.vector_store %arg7[%c0_18, %c0_19], %25 {strides = array<i32>} : memref<8x128xf32, #tpu.memory_space<vmem>>, vector<8x128xf32>,
    return
  }
}

</mosaic_0001>

<llo_original>
// kernel: tpu_custom_call.1
$region0: #{tpu_custom_call.1}
  #allocation0 [shape = 'u32[]', space=smem, size = 0x4, offset = 0x4, fixed_abs, tag = 'smem constant byte address 0x4 - core index']
  #allocation1 [shape = 'u32[144,128]{1,0:T(1,128)}', space=vmem, size = 0x12000, scoped, tag = 'internal scratch']
  %s0 = inlined_call_operand.hbm [shape: f32[8,128], index: 0, kind: input, shape index: {}]
  %s1 = inlined_call_operand.hbm [shape: f32[128,384], index: 1, kind: input, shape index: {}]
  %s2 = inlined_call_operand.vmem [shape: f32[128,16], index: 2, kind: input, shape index: {}]
  %s3 = inlined_call_operand.vmem [shape: f32[16,128], index: 3, kind: input, shape index: {}]
  %s4 = inlined_call_operand.vmem [shape: f32[16,128], index: 4, kind: input, shape index: {}]
  %s5 = inlined_call_operand.vmem [shape: f32[128,128], index: 5, kind: input, shape index: {}]
  %s6 = inlined_call_operand.vmem [shape: f32[1,128], index: 6, kind: input, shape index: {}]
  %s7 = inlined_call_operand.hbm [shape: f32[8,128], index: 7, kind: output, shape index: {}]
  %s8 = sld [smem:[#allocation0]]
  $region46: #{tpu_custom_call.1} parent=0
    _
  %s10 = ssub.s32 1, %s8
  %s11 = scalar_select 0, %s10, %s8
  $region1: #{tpu_custom_call.1} parent=0
    #allocation2 [shape = 'u8[4096]{0}', space=vmem, size = 0x1000, scoped, tag = 'input window, operand 0, single buffered']
    #allocation3 [shape = 's32[1]{0}', space=sflag, size = 0x4, scoped, tag = 'scoped memory for tpu_custom_call.1']
    #allocation4 [shape = 's32[1]{0}', space=sflag, size = 0x4, scoped, tag = 'scoped memory for tpu_custom_call.1']
    #allocation5 [shape = 'u8[196608]{0}', space=vmem, size = 0x30000, scoped, tag = 'input window, operand 1, single buffered']
    #allocation6 [shape = 's32[1]{0}', space=sflag, size = 0x4, scoped, tag = 'scoped memory for tpu_custom_call.1']
    #allocation7 [shape = 'u8[4096]{0}', space=vmem, size = 0x1000, scoped, tag = 'output window, operand 0, single buffered']
    %12 = vsyncpa [#allocation3], 0
    %13 = vsyncpa [#allocation6], 0
    %14 = vsyncpa [#allocation4], 0
    // Predicated region
    $region2: #{tpu_custom_call.1} parent=1 // pred_check
      _
    $region3: #{tpu_custom_call.1} parent=1 // pred_check_branch
      %16 = sbr.rel (0) target = $region5
    $region4: #{tpu_custom_call.1} parent=1 // pred_region
      %s18 = ssub.s32 128, 128
      %19 = vsyncadd [#allocation3], %s18
      %s21 = sshll.u32 [#allocation2], 4
      %s22 = int_to_ptr.vmem [resolvable:$true] %s21
      %24 = dma.hbm_to_vmem [thread:$0]  %s0, 128, %s22, [#allocation3]
    $region5: #{tpu_custom_call.1} parent=1 // pred_fallthru
      _
    // Predicated region
    $region6: #{tpu_custom_call.1} parent=1 // pred_check
      _
    $region7: #{tpu_custom_call.1} parent=1 // pred_check_branch
      %26 = sbr.rel (0) target = $region9
    $region8: #{tpu_custom_call.1} parent=1 // pred_region
      %s28 = ssub.s32 6144, 6144
      %29 = vsyncadd [#allocation6], %s28
      %s30 = sshll.u32 [#allocation5], 4
      %s31 = int_to_ptr.vmem [resolvable:$true] %s30
      %36 = dma.hbm_to_vmem [thread:$0]  %s1, 6144, %s31, [#allocation6], 384, 384, 24
    $region9: #{tpu_custom_call.1} parent=1 // pred_fallthru
      _
    // Predicated region
    $region10: #{tpu_custom_call.1} parent=1 // pred_check
      _
    $region11: #{tpu_custom_call.1} parent=1 // pred_check_branch
      %38 = sbr.rel (0) target = $region13
    $region12: #{tpu_custom_call.1} parent=1 // pred_region
      _
    $region13: #{tpu_custom_call.1} parent=1 // pred_fallthru
      _
    // Predicated region
    $region14: #{tpu_custom_call.1} parent=1 // pred_check
      _
    $region15: #{tpu_custom_call.1} parent=1 // pred_check_branch
      %40 = sbr.rel (0) target = $region17
    $region16: #{tpu_custom_call.1} parent=1 // pred_region
      _
    $region17: #{tpu_custom_call.1} parent=1 // pred_fallthru
      _
    // Predicated region
    $region18: #{tpu_custom_call.1} parent=1 // pred_check
      _
    $region19: #{tpu_custom_call.1} parent=1 // pred_check_branch
      %42 = sbr.rel (0) target = $region21
    $region20: #{tpu_custom_call.1} parent=1 // pred_region
      _
    $region21: #{tpu_custom_call.1} parent=1 // pred_fallthru
      _
    // Predicated region
    $region22: #{tpu_custom_call.1} parent=1 // pred_check
      _
    $region23: #{tpu_custom_call.1} parent=1 // pred_check_branch
      %44 = sbr.rel (0) target = $region25
    $region24: #{tpu_custom_call.1} parent=1 // pred_region
      _
    $region25: #{tpu_custom_call.1} parent=1 // pred_fallthru
      _
    // Predicated region
    $region26: #{tpu_custom_call.1} parent=1 // pred_check
      _
    $region27: #{tpu_custom_call.1} parent=1 // pred_check_branch
      %46 = sbr.rel (0) target = $region29
    $region28: #{tpu_custom_call.1} parent=1 // pred_region
      _
    $region29: #{tpu_custom_call.1} parent=1 // pred_fallthru
      _
    // Predicated region
    $region30: #{tpu_custom_call.1} parent=1 // pred_check
      _
    $region31: #{tpu_custom_call.1} parent=1 // pred_check_branch
      %48 = sbr.rel (0) target = $region33
    $region32: #{tpu_custom_call.1} parent=1 // pred_region
      %49 = dma.done [#allocation3], 128
    $region33: #{tpu_custom_call.1} parent=1 // pred_fallthru
      _
    // Predicated region
    $region34: #{tpu_custom_call.1} parent=1 // pred_check
      _
    $region35: #{tpu_custom_call.1} parent=1 // pred_check_branch
      %51 = sbr.rel (0) target = $region37
    $region36: #{tpu_custom_call.1} parent=1 // pred_region
      %52 = dma.done [#allocation6], 6144
    $region37: #{tpu_custom_call.1} parent=1 // pred_fallthru
      _
    %v53 = vld [vmem:[#allocation2] sm:$0xff]
    %v54 = vld [vmem:[#allocation5] sm:$0xff]
    %v55 = vld [vmem:[#allocation5 + $0x8] sm:$0xff]
    %v56 = vld [vmem:[#allocation5 + $0x10] sm:$0xff]
    %v57 = vld [vmem:[#allocation5 + $0x18] sm:$0xff]
    %v58 = vld [vmem:[#allocation5 + $0x20] sm:$0xff]
    %v59 = vld [vmem:[#allocation5 + $0x28] sm:$0xff]
    %v60 = vld [vmem:[#allocation5 + $0x30] sm:$0xff]
    %v61 = vld [vmem:[#allocation5 + $0x38] sm:$0xff]
    %v62 = vld [vmem:[#allocation5 + $0x40] sm:$0xff]
    %v63 = vld [vmem:[#allocation5 + $0x48] sm:$0xff]
    %v64 = vld [vmem:[#allocation5 + $0x50] sm:$0xff]
    %v65 = vld [vmem:[#allocation5 + $0x58] sm:$0xff]
    %v66 = vld [vmem:[#allocation5 + $0x60] sm:$0xff]
    %v67 = vld [vmem:[#allocation5 + $0x68] sm:$0xff]
    %v68 = vld [vmem:[#allocation5 + $0x70] sm:$0xff]
    %v69 = vld [vmem:[#allocation5 + $0x78] sm:$0xff]
    %v70 = vld [vmem:[#allocation5 + $0x80] sm:$0xff]
    %v71 = vld [vmem:[#allocation5 + $0x88] sm:$0xff]
    %v72 = vld [vmem:[#allocation5 + $0x90] sm:$0xff]
    %v73 = vld [vmem:[#allocation5 + $0x98] sm:$0xff]
    %v74 = vld [vmem:[#allocation5 + $0xa0] sm:$0xff]
    %v75 = vld [vmem:[#allocation5 + $0xa8] sm:$0xff]
    %v76 = vld [vmem:[#allocation5 + $0xb0] sm:$0xff]
    %v77 = vld [vmem:[#allocation5 + $0xb8] sm:$0xff]
    %v78 = vld [vmem:[#allocation5 + $0xc0] sm:$0xff]
    %v79 = vld [vmem:[#allocation5 + $0xc8] sm:$0xff]
    %v80 = vld [vmem:[#allocation5 + $0xd0] sm:$0xff]
    %v81 = vld [vmem:[#allocation5 + $0xd8] sm:$0xff]
    %v82 = vld [vmem:[#allocation5 + $0xe0] sm:$0xff]
    %v83 = vld [vmem:[#allocation5 + $0xe8] sm:$0xff]
    %v84 = vld [vmem:[#allocation5 + $0xf0] sm:$0xff]
    %v85 = vld [vmem:[#allocation5 + $0xf8] sm:$0xff]
    %v86 = vld [vmem:[#allocation5 + $0x100] sm:$0xff]
    %v87 = vld [vmem:[#allocation5 + $0x108] sm:$0xff]
    %v88 = vld [vmem:[#allocation5 + $0x110] sm:$0xff]
    %v89 = vld [vmem:[#allocation5 + $0x118] sm:$0xff]
    %v90 = vld [vmem:[#allocation5 + $0x120] sm:$0xff]
    %v91 = vld [vmem:[#allocation5 + $0x128] sm:$0xff]
    %v92 = vld [vmem:[#allocation5 + $0x130] sm:$0xff]
    %v93 = vld [vmem:[#allocation5 + $0x138] sm:$0xff]
    %v94 = vld [vmem:[#allocation5 + $0x140] sm:$0xff]
    %v95 = vld [vmem:[#allocation5 + $0x148] sm:$0xff]
    %v96 = vld [vmem:[#allocation5 + $0x150] sm:$0xff]
    %v97 = vld [vmem:[#allocation5 + $0x158] sm:$0xff]
    %v98 = vld [vmem:[#allocation5 + $0x160] sm:$0xff]
    %v99 = vld [vmem:[#allocation5 + $0x168] sm:$0xff]
    %v100 = vld [vmem:[#allocation5 + $0x170] sm:$0xff]
    %v101 = vld [vmem:[#allocation5 + $0x178] sm:$0xff]
    %102 = vmatprep.subr.mxu0 %v55
    %103 = vmatpush1.msra.mxu0 %v54
    %104 = vmatprep.subr.mxu0 %v58
    %105 = vmatpush1.msra.mxu0 %v57
    %106 = vmatprep.subr.mxu0 %v61
    %107 = vmatpush1.msra.mxu0 %v60
    %108 = vmatprep.subr.mxu0 %v64
    %109 = vmatpush1.msra.mxu0 %v63
    %110 = vmatprep.subr.mxu0 %v67
    %111 = vmatpush1.msra.mxu0 %v66
    %112 = vmatprep.subr.mxu0 %v70
    %113 = vmatpush1.msra.mxu0 %v69
    %114 = vmatprep.subr.mxu0 %v73
    %115 = vmatpush1.msra.mxu0 %v72
    %116 = vmatprep.subr.mxu0 %v76
    %117 = vmatpush1.msra.mxu0 %v75
    %118 = vmatprep.subr.mxu0 %v79
    %119 = vmatpush1.msra.mxu0 %v78
    %120 = vmatprep.subr.mxu0 %v82
    %121 = vmatpush1.msra.mxu0 %v81
    %122 = vmatprep.subr.mxu0 %v85
    %123 = vmatpush1.msra.mxu0 %v84
    %124 = vmatprep.subr.mxu0 %v88
    %125 = vmatpush1.msra.mxu0 %v87
    %126 = vmatprep.subr.mxu0 %v91
    %127 = vmatpush1.msra.mxu0 %v90
    %128 = vmatprep.subr.mxu0 %v94
    %129 = vmatpush1.msra.mxu0 %v93
    %130 = vmatprep.subr.mxu0 %v97
    %131 = vmatpush1.msra.mxu0 %v96
    %132 = vmatprep.subr.mxu0 %v100
    %133 = vmatpush1.msra.mxu0 %v99
    %134 = vmatprep.subr.mxu0 0.0
    %135 = vmatpush1.msra.mxu0 0.0
    %136 = vmatprep.subr.mxu0 0.0
    %137 = vmatpush1.msra.mxu0 0.0
    %138 = vmatprep.subr.mxu0 0.0
    %139 = vmatpush1.msra.mxu0 0.0
    %140 = vmatprep.subr.mxu0 0.0
    %141 = vmatpush1.msra.mxu0 0.0
    %142 = vmatprep.subr.mxu0 0.0
    %143 = vmatpush1.msra.mxu0 0.0
    %144 = vmatprep.subr.mxu0 0.0
    %145 = vmatpush1.msra.mxu0 0.0
    %146 = vmatprep.subr.mxu0 0.0
    %147 = vmatpush1.msra.mxu0 0.0
    %148 = vmatprep.subr.mxu0 0.0
    %149 = vmatpush1.msra.mxu0 0.0
    %150 = vmatprep.subr.mxu0 0.0
    %151 = vmatpush1.msra.mxu0 0.0
    %152 = vmatprep.subr.mxu0 0.0
    %153 = vmatpush1.msra.mxu0 0.0
    %154 = vmatprep.subr.mxu0 0.0
    %155 = vmatpush1.msra.mxu0 0.0
    %156 = vmatprep.subr.mxu0 0.0
    %157 = vmatpush1.msra.mxu0 0.0
    %158 = vmatprep.subr.mxu0 0.0
    %159 = vmatpush1.msra.mxu0 0.0
    %160 = vmatprep.subr.mxu0 0.0
    %161 = vmatpush1.msra.mxu0 0.0
    %162 = vmatprep.subr.mxu0 0.0
    %163 = vmatpush1.msra.mxu0 0.0
    %164 = vmatprep.subr.mxu0 0.0
    %165 = vmatpush1.msra.mxu0 0.0
    %166 = vmatprep.mubr.f32.mxu0 0.0
    %167 = vmatmul.mubr.f32.gmra.mrb[0].mxu0 %v53
    %v168 = vpop.f32.mrb[0].mxu0
    %v169 = vadd.f32 0.0, %v168
    %v170 = vpop.f32.mrb[0].mxu0
    %v171 = vadd.f32 0.0, %v170
    %172 = vdwg.mxu0
    %173 = vmatprep.subr.mxu0 0.0
    %174 = vmatpush1.msra.mxu0 %v56
    %175 = vmatprep.subr.mxu0 0.0
    %176 = vmatpush1.msra.mxu0 %v59
    %177 = vmatprep.subr.mxu0 0.0
    %178 = vmatpush1.msra.mxu0 %v62
    %179 = vmatprep.subr.mxu0 0.0
    %180 = vmatpush1.msra.mxu0 %v65
    %181 = vmatprep.subr.mxu0 0.0
    %182 = vmatpush1.msra.mxu0 %v68
    %183 = vmatprep.subr.mxu0 0.0
    %184 = vmatpush1.msra.mxu0 %v71
    %185 = vmatprep.subr.mxu0 0.0
    %186 = vmatpush1.msra.mxu0 %v74
    %187 = vmatprep.subr.mxu0 0.0
    %188 = vmatpush1.msra.mxu0 %v77
    %189 = vmatprep.subr.mxu0 0.0
    %190 = vmatpush1.msra.mxu0 %v80
    %191 = vmatprep.subr.mxu0 0.0
    %192 = vmatpush1.msra.mxu0 %v83
    %193 = vmatprep.subr.mxu0 0.0
    %194 = vmatpush1.msra.mxu0 %v86
    %195 = vmatprep.subr.mxu0 0.0
    %196 = vmatpush1.msra.mxu0 %v89
    %197 = vmatprep.subr.mxu0 0.0
    %198 = vmatpush1.msra.mxu0 %v92
    %199 = vmatprep.subr.mxu0 0.0
    %200 = vmatpush1.msra.mxu0 %v95
    %201 = vmatprep.subr.mxu0 0.0
    %202 = vmatpush1.msra.mxu0 %v98
    %203 = vmatprep.subr.mxu0 0.0
    %204 = vmatpush1.msra.mxu0 %v101
    %205 = vmatprep.subr.mxu0 0.0
    %206 = vmatpush1.msra.mxu0 0.0
    %207 = vmatprep.subr.mxu0 0.0
    %208 = vmatpush1.msra.mxu0 0.0
    %209 = vmatprep.subr.mxu0 0.0
    %210 = vmatpush1.msra.mxu0 0.0
    %211 = vmatprep.subr.mxu0 0.0
    %212 = vmatpush1.msra.mxu0 0.0
    %213 = vmatprep.subr.mxu0 0.0
    %214 = vmatpush1.msra.mxu0 0.0
    %215 = vmatprep.subr.mxu0 0.0
    %216 = vmatpush1.msra.mxu0 0.0
    %217 = vmatprep.subr.mxu0 0.0
    %218 = vmatpush1.msra.mxu0 0.0
    %219 = vmatprep.subr.mxu0 0.0
    %220 = vmatpush1.msra.mxu0 0.0
    %221 = vmatprep.subr.mxu0 0.0
    %222 = vmatpush1.msra.mxu0 0.0
    %223 = vmatprep.subr.mxu0 0.0
    %224 = vmatpush1.msra.mxu0 0.0
    %225 = vmatprep.subr.mxu0 0.0
    %226 = vmatpush1.msra.mxu0 0.0
    %227 = vmatprep.subr.mxu0 0.0
    %228 = vmatpush1.msra.mxu0 0.0
    %229 = vmatprep.subr.mxu0 0.0
    %230 = vmatpush1.msra.mxu0 0.0
    %231 = vmatprep.subr.mxu0 0.0
    %232 = vmatpush1.msra.mxu0 0.0
    %233 = vmatprep.subr.mxu0 0.0
    %234 = vmatpush1.msra.mxu0 0.0
    %235 = vmatprep.subr.mxu0 0.0
    %236 = vmatpush1.msra.mxu0 0.0
    %237 = vmatprep.mubr.f32.mxu0 0.0
    %238 = vmatmul.mubr.f32.gmra.mrb[0].mxu0 %v53
    %v239 = vpop.f32.mrb[0].mxu0
    %v240 = vadd.f32 0.0, %v239
    %v241 = vpop.f32.mrb[0].mxu0
    %242 = vdwg.mxu0
    %v243 = vmul.f32 %v169, %v171
    %v244 = vld [vmem:[%s2] sm:$0xff]
    %v245 = vld [vmem:[%s2 + $0x8] sm:$0xff]
    %v246 = vld [vmem:[%s2 + $0x10] sm:$0xff]
    %v247 = vld [vmem:[%s2 + $0x18] sm:$0xff]
    %v248 = vld [vmem:[%s2 + $0x20] sm:$0xff]
    %v249 = vld [vmem:[%s2 + $0x28] sm:$0xff]
    %v250 = vld [vmem:[%s2 + $0x30] sm:$0xff]
    %v251 = vld [vmem:[%s2 + $0x38] sm:$0xff]
    %v252 = vld [vmem:[%s2 + $0x40] sm:$0xff]
    %v253 = vld [vmem:[%s2 + $0x48] sm:$0xff]
    %v254 = vld [vmem:[%s2 + $0x50] sm:$0xff]
    %v255 = vld [vmem:[%s2 + $0x58] sm:$0xff]
    %v256 = vld [vmem:[%s2 + $0x60] sm:$0xff]
    %v257 = vld [vmem:[%s2 + $0x68] sm:$0xff]
    %v258 = vld [vmem:[%s2 + $0x70] sm:$0xff]
    %v259 = vld [vmem:[%s2 + $0x78] sm:$0xff]
    %260 = vmatprep.subr.mxu0 0.0
    %261 = vmatpush1.msra.mxu0 %v244
    %262 = vmatprep.subr.mxu0 0.0
    %263 = vmatpush1.msra.mxu0 %v245
    %264 = vmatprep.subr.mxu0 0.0
    %265 = vmatpush1.msra.mxu0 %v246
    %266 = vmatprep.subr.mxu0 0.0
    %267 = vmatpush1.msra.mxu0 %v247
    %268 = vmatprep.subr.mxu0 0.0
    %269 = vmatpush1.msra.mxu0 %v248
    %270 = vmatprep.subr.mxu0 0.0
    %271 = vmatpush1.msra.mxu0 %v249
    %272 = vmatprep.subr.mxu0 0.0
    %273 = vmatpush1.msra.mxu0 %v250
    %274 = vmatprep.subr.mxu0 0.0
    %275 = vmatpush1.msra.mxu0 %v251
    %276 = vmatprep.subr.mxu0 0.0
    %277 = vmatpush1.msra.mxu0 %v252
    %278 = vmatprep.subr.mxu0 0.0
    %279 = vmatpush1.msra.mxu0 %v253
    %280 = vmatprep.subr.mxu0 0.0
    %281 = vmatpush1.msra.mxu0 %v254
    %282 = vmatprep.subr.mxu0 0.0
    %283 = vmatpush1.msra.mxu0 %v255
    %284 = vmatprep.subr.mxu0 0.0
    %285 = vmatpush1.msra.mxu0 %v256
    %286 = vmatprep.subr.mxu0 0.0
    %287 = vmatpush1.msra.mxu0 %v257
    %288 = vmatprep.subr.mxu0 0.0
    %289 = vmatpush1.msra.mxu0 %v258
    %290 = vmatprep.subr.mxu0 0.0
    %291 = vmatpush1.msra.mxu0 %v259
    %292 = vmatprep.subr.mxu0 0.0
    %293 = vmatpush1.msra.mxu0 0.0
    %294 = vmatprep.subr.mxu0 0.0
    %295 = vmatpush1.msra.mxu0 0.0
    %296 = vmatprep.subr.mxu0 0.0
    %297 = vmatpush1.msra.mxu0 0.0
    %298 = vmatprep.subr.mxu0 0.0
    %299 = vmatpush1.msra.mxu0 0.0
    %300 = vmatprep.subr.mxu0 0.0
    %301 = vmatpush1.msra.mxu0 0.0
    %302 = vmatprep.subr.mxu0 0.0
    %303 = vmatpush1.msra.mxu0 0.0
    %304 = vmatprep.subr.mxu0 0.0
    %305 = vmatpush1.msra.mxu0 0.0
    %306 = vmatprep.subr.mxu0 0.0
    %307 = vmatpush1.msra.mxu0 0.0
    %308 = vmatprep.subr.mxu0 0.0
    %309 = vmatpush1.msra.mxu0 0.0
    %310 = vmatprep.subr.mxu0 0.0
    %311 = vmatpush1.msra.mxu0 0.0
    %312 = vmatprep.subr.mxu0 0.0
    %313 = vmatpush1.msra.mxu0 0.0
    %314 = vmatprep.subr.mxu0 0.0
    %315 = vmatpush1.msra.mxu0 0.0
    %316 = vmatprep.subr.mxu0 0.0
    %317 = vmatpush1.msra.mxu0 0.0
    %318 = vmatprep.subr.mxu0 0.0
    %319 = vmatpush1.msra.mxu0 0.0
    %320 = vmatprep.subr.mxu0 0.0
    %321 = vmatpush1.msra.mxu0 0.0
    %322 = vmatprep.subr.mxu0 0.0
    %323 = vmatpush1.msra.mxu0 0.0
    %324 = vmatprep.mubr.f32.mxu0 0.0
    %325 = vmatmul.mubr.f32.gmra.mrb[0].mxu0 %v243
    %v326 = vpop.f32.mrb[0].mxu0
    %v327 = vadd.f32 0.0, %v326
    %v328 = vpop.f32.mrb[0].mxu0
    %329 = vdwg.mxu0
    %vm330 = vcmask 130048
    %v331 = vsel %vm330, %v327, -inf
    %332 = vmax.xlane.f32.xlu0 %v331
    %v333 = vpop.xlane.xlu0 %332
    %v334 = vsub.f32 %v327, %v333
    %v335 = vmul.f32 %v334, 1.442695
    %v336 = vpow.pop %v335
    %v337 = vld [vmem:[%s3] sm:$0xff]
    %v338 = vld [vmem:[%s3 + $0x8] sm:$0xff]
    %v340 = vsel %vm330, %v336, 0
    %342 = vmatprep.subr.mxu0 0.0
    %343 = vmatpush1.msra.mxu0 %v337
    %344 = vmatprep.subr.mxu0 0.0
    %345 = vmatpush1.msra.mxu0 %v338
    %346 = vmatprep.subr.mxu0 0.0
    %347 = vmatpush1.msra.mxu0 0.0
    %348 = vmatprep.subr.mxu0 0.0
    %349 = vmatpush1.msra.mxu0 0.0
    %350 = vmatprep.subr.mxu0 0.0
    %351 = vmatpush1.msra.mxu0 0.0
    %352 = vmatprep.subr.mxu0 0.0
    %353 = vmatpush1.msra.mxu0 0.0
    %354 = vmatprep.subr.mxu0 0.0
    %355 = vmatpush1.msra.mxu0 0.0
    %356 = vmatprep.subr.mxu0 0.0
    %357 = vmatpush1.msra.mxu0 0.0
    %358 = vmatprep.subr.mxu0 0.0
    %359 = vmatpush1.msra.mxu0 0.0
    %360 = vmatprep.subr.mxu0 0.0
    %361 = vmatpush1.msra.mxu0 0.0
    %362 = vmatprep.subr.mxu0 0.0
    %363 = vmatpush1.msra.mxu0 0.0
    %364 = vmatprep.subr.mxu0 0.0
    %365 = vmatpush1.msra.mxu0 0.0
    %366 = vmatprep.subr.mxu0 0.0
    %367 = vmatpush1.msra.mxu0 0.0
    %368 = vmatprep.subr.mxu0 0.0
    %369 = vmatpush1.msra.mxu0 0.0
    %370 = vmatprep.subr.mxu0 0.0
    %371 = vmatpush1.msra.mxu0 0.0
    %372 = vmatprep.subr.mxu0 0.0
    %373 = vmatpush1.msra.mxu0 0.0
    %374 = vmatprep.subr.mxu0 0.0
    %375 = vmatpush1.msra.mxu0 0.0
    %376 = vmatprep.subr.mxu0 0.0
    %377 = vmatpush1.msra.mxu0 0.0
    %378 = vmatprep.subr.mxu0 0.0
    %379 = vmatpush1.msra.mxu0 0.0
    %380 = vmatprep.subr.mxu0 0.0
    %381 = vmatpush1.msra.mxu0 0.0
    %382 = vmatprep.subr.mxu0 0.0
    %383 = vmatpush1.msra.mxu0 0.0
    %384 = vmatprep.subr.mxu0 0.0
    %385 = vmatpush1.msra.mxu0 0.0
    %386 = vmatprep.subr.mxu0 0.0
    %387 = vmatpush1.msra.mxu0 0.0
    %388 = vmatprep.subr.mxu0 0.0
    %389 = vmatpush1.msra.mxu0 0.0
    %390 = vmatprep.subr.mxu0 0.0
    %391 = vmatpush1.msra.mxu0 0.0
    %392 = vmatprep.subr.mxu0 0.0
    %393 = vmatpush1.msra.mxu0 0.0
    %394 = vmatprep.subr.mxu0 0.0
    %395 = vmatpush1.msra.mxu0 0.0
    %396 = vmatprep.subr.mxu0 0.0
    %397 = vmatpush1.msra.mxu0 0.0
    %398 = vmatprep.subr.mxu0 0.0
    %399 = vmatpush1.msra.mxu0 0.0
    %400 = vmatprep.subr.mxu0 0.0
    %401 = vmatpush1.msra.mxu0 0.0
    %402 = vmatprep.subr.mxu0 0.0
    %403 = vmatpush1.msra.mxu0 0.0
    %404 = vmatprep.subr.mxu0 0.0
    %405 = vmatpush1.msra.mxu0 0.0
    %406 = vmatprep.mubr.f32.mxu0 0.0
    %407 = vmatmul.mubr.f32.gmra.mrb[0].mxu0 %v340
    %v408 = vpop.f32.mrb[0].mxu0
    %v409 = vadd.f32 0.0, %v408
    %v410 = vpop.f32.mrb[0].mxu0
    %411 = vdwg.mxu0
    %v412 = vld [vmem:[%s4] sm:$0xff]
    %v413 = vld [vmem:[%s4 + $0x8] sm:$0xff]
    %414 = vmatprep.subr.mxu0 0.0
    %415 = vmatpush1.msra.mxu0 %v412
    %416 = vmatprep.subr.mxu0 0.0
    %417 = vmatpush1.msra.mxu0 %v413
    %418 = vmatprep.subr.mxu0 0.0
    %419 = vmatpush1.msra.mxu0 0.0
    %420 = vmatprep.subr.mxu0 0.0
    %421 = vmatpush1.msra.mxu0 0.0
    %422 = vmatprep.subr.mxu0 0.0
    %423 = vmatpush1.msra.mxu0 0.0
    %424 = vmatprep.subr.mxu0 0.0
    %425 = vmatpush1.msra.mxu0 0.0
    %426 = vmatprep.subr.mxu0 0.0
    %427 = vmatpush1.msra.mxu0 0.0
    %428 = vmatprep.subr.mxu0 0.0
    %429 = vmatpush1.msra.mxu0 0.0
    %430 = vmatprep.subr.mxu0 0.0
    %431 = vmatpush1.msra.mxu0 0.0
    %432 = vmatprep.subr.mxu0 0.0
    %433 = vmatpush1.msra.mxu0 0.0
    %434 = vmatprep.subr.mxu0 0.0
    %435 = vmatpush1.msra.mxu0 0.0
    %436 = vmatprep.subr.mxu0 0.0
    %437 = vmatpush1.msra.mxu0 0.0
    %438 = vmatprep.subr.mxu0 0.0
    %439 = vmatpush1.msra.mxu0 0.0
    %440 = vmatprep.subr.mxu0 0.0
    %441 = vmatpush1.msra.mxu0 0.0
    %442 = vmatprep.subr.mxu0 0.0
    %443 = vmatpush1.msra.mxu0 0.0
    %444 = vmatprep.subr.mxu0 0.0
    %445 = vmatpush1.msra.mxu0 0.0
    %446 = vmatprep.subr.mxu0 0.0
    %447 = vmatpush1.msra.mxu0 0.0
    %448 = vmatprep.subr.mxu0 0.0
    %449 = vmatpush1.msra.mxu0 0.0
    %450 = vmatprep.subr.mxu0 0.0
    %451 = vmatpush1.msra.mxu0 0.0
    %452 = vmatprep.subr.mxu0 0.0
    %453 = vmatpush1.msra.mxu0 0.0
    %454 = vmatprep.subr.mxu0 0.0
    %455 = vmatpush1.msra.mxu0 0.0
    %456 = vmatprep.subr.mxu0 0.0
    %457 = vmatpush1.msra.mxu0 0.0
    %458 = vmatprep.subr.mxu0 0.0
    %459 = vmatpush1.msra.mxu0 0.0
    %460 = vmatprep.subr.mxu0 0.0
    %461 = vmatpush1.msra.mxu0 0.0
    %462 = vmatprep.subr.mxu0 0.0
    %463 = vmatpush1.msra.mxu0 0.0
    %464 = vmatprep.subr.mxu0 0.0
    %465 = vmatpush1.msra.mxu0 0.0
    %466 = vmatprep.subr.mxu0 0.0
    %467 = vmatpush1.msra.mxu0 0.0
    %468 = vmatprep.subr.mxu0 0.0
    %469 = vmatpush1.msra.mxu0 0.0
    %470 = vmatprep.subr.mxu0 0.0
    %471 = vmatpush1.msra.mxu0 0.0
    %472 = vmatprep.subr.mxu0 0.0
    %473 = vmatpush1.msra.mxu0 0.0
    %474 = vmatprep.subr.mxu0 0.0
    %475 = vmatpush1.msra.mxu0 0.0
    %476 = vmatprep.subr.mxu0 0.0
    %477 = vmatpush1.msra.mxu0 0.0
    %478 = vmatprep.mubr.f32.mxu0 0.0
    %479 = vmatmul.mubr.f32.gmra.mrb[0].mxu0 %v340
    %v480 = vpop.f32.mrb[0].mxu0
    %v481 = vadd.f32 0.0, %v480
    %v482 = vpop.f32.mrb[0].mxu0
    %483 = vdwg.mxu0
    %v484 = vrcp.pop %v481
    %v485 = vmul.f32 %v409, %v484
    %v486 = vmul.f32 %v485, %v240
    %v487 = vld [vmem:[%s5] sm:$0xff]
    %v488 = vld [vmem:[%s5 + $0x8] sm:$0xff]
    %v489 = vld [vmem:[%s5 + $0x10] sm:$0xff]
    %v490 = vld [vmem:[%s5 + $0x18] sm:$0xff]
    %v491 = vld [vmem:[%s5 + $0x20] sm:$0xff]
    %v492 = vld [vmem:[%s5 + $0x28] sm:$0xff]
    %v493 = vld [vmem:[%s5 + $0x30] sm:$0xff]
    %v494 = vld [vmem:[%s5 + $0x38] sm:$0xff]
    %v495 = vld [vmem:[%s5 + $0x40] sm:$0xff]
    %v496 = vld [vmem:[%s5 + $0x48] sm:$0xff]
    %v497 = vld [vmem:[%s5 + $0x50] sm:$0xff]
    %v498 = vld [vmem:[%s5 + $0x58] sm:$0xff]
    %v499 = vld [vmem:[%s5 + $0x60] sm:$0xff]
    %v500 = vld [vmem:[%s5 + $0x68] sm:$0xff]
    %v501 = vld [vmem:[%s5 + $0x70] sm:$0xff]
    %v502 = vld [vmem:[%s5 + $0x78] sm:$0xff]
    %v503 = vld [vmem:[%s6] sm:$0x1]
    %v505 = vlaneseq
    %v506 = vshrl.u32 %v505, 7
    %v507 = vsub.s32 0, %v506
    %v508 = vrot.slane %v503, %v507
    %510 = vmatprep.subr.mxu0 0.0
    %511 = vmatpush1.msra.mxu0 %v487
    %512 = vmatprep.subr.mxu0 0.0
    %513 = vmatpush1.msra.mxu0 %v488
    %514 = vmatprep.subr.mxu0 0.0
    %515 = vmatpush1.msra.mxu0 %v489
    %516 = vmatprep.subr.mxu0 0.0
    %517 = vmatpush1.msra.mxu0 %v490
    %518 = vmatprep.subr.mxu0 0.0
    %519 = vmatpush1.msra.mxu0 %v491
    %520 = vmatprep.subr.mxu0 0.0
    %521 = vmatpush1.msra.mxu0 %v492
    %522 = vmatprep.subr.mxu0 0.0
    %523 = vmatpush1.msra.mxu0 %v493
    %524 = vmatprep.subr.mxu0 0.0
    %525 = vmatpush1.msra.mxu0 %v494
    %526 = vmatprep.subr.mxu0 0.0
    %527 = vmatpush1.msra.mxu0 %v495
    %528 = vmatprep.subr.mxu0 0.0
    %529 = vmatpush1.msra.mxu0 %v496
    %530 = vmatprep.subr.mxu0 0.0
    %531 = vmatpush1.msra.mxu0 %v497
    %532 = vmatprep.subr.mxu0 0.0
    %533 = vmatpush1.msra.mxu0 %v498
    %534 = vmatprep.subr.mxu0 0.0
    %535 = vmatpush1.msra.mxu0 %v499
    %536 = vmatprep.subr.mxu0 0.0
    %537 = vmatpush1.msra.mxu0 %v500
    %538 = vmatprep.subr.mxu0 0.0
    %539 = vmatpush1.msra.mxu0 %v501
    %540 = vmatprep.subr.mxu0 0.0
    %541 = vmatpush1.msra.mxu0 %v502
    %542 = vmatprep.subr.mxu0 0.0
    %543 = vmatpush1.msra.mxu0 0.0
    %544 = vmatprep.subr.mxu0 0.0
    %545 = vmatpush1.msra.mxu0 0.0
    %546 = vmatprep.subr.mxu0 0.0
    %547 = vmatpush1.msra.mxu0 0.0
    %548 = vmatprep.subr.mxu0 0.0
    %549 = vmatpush1.msra.mxu0 0.0
    %550 = vmatprep.subr.mxu0 0.0
    %551 = vmatpush1.msra.mxu0 0.0
    %552 = vmatprep.subr.mxu0 0.0
    %553 = vmatpush1.msra.mxu0 0.0
    %554 = vmatprep.subr.mxu0 0.0
    %555 = vmatpush1.msra.mxu0 0.0
    %556 = vmatprep.subr.mxu0 0.0
    %557 = vmatpush1.msra.mxu0 0.0
    %558 = vmatprep.subr.mxu0 0.0
    %559 = vmatpush1.msra.mxu0 0.0
    %560 = vmatprep.subr.mxu0 0.0
    %561 = vmatpush1.msra.mxu0 0.0
    %562 = vmatprep.subr.mxu0 0.0
    %563 = vmatpush1.msra.mxu0 0.0
    %564 = vmatprep.subr.mxu0 0.0
    %565 = vmatpush1.msra.mxu0 0.0
    %566 = vmatprep.subr.mxu0 0.0
    %567 = vmatpush1.msra.mxu0 0.0
    %568 = vmatprep.subr.mxu0 0.0
    %569 = vmatpush1.msra.mxu0 0.0
    %570 = vmatprep.subr.mxu0 0.0
    %571 = vmatpush1.msra.mxu0 0.0
    %572 = vmatprep.subr.mxu0 0.0
    %573 = vmatpush1.msra.mxu0 0.0
    %574 = vmatprep.mubr.f32.mxu0 0.0
    %575 = vmatmul.mubr.f32.gmra.mrb[0].mxu0 %v486
    %v576 = vpop.f32.mrb[0].mxu0
    %v577 = vadd.f32 %v508, %v576
    %v578 = vpop.f32.mrb[0].mxu0
    %579 = vdwg.mxu0
    %580 = vst [vmem:[#allocation7] sm:$0xff] %v577
    // Predicated region
    $region38: #{tpu_custom_call.1} parent=1 // pred_check
      _
    $region39: #{tpu_custom_call.1} parent=1 // pred_check_branch
      %582 = sbr.rel (0) target = $region41
    $region40: #{tpu_custom_call.1} parent=1 // pred_region
      %s584 = ssub.s32 128, 128
      %585 = vsyncadd [#allocation4], %s584
      %s587 = sshll.u32 [#allocation7], 4
      %s588 = int_to_ptr.vmem [resolvable:$true] %s587
      %590 = dma.vmem_to_hbm [thread:$0]  %s588, 128, %s7, [#allocation4]
    $region41: #{tpu_custom_call.1} parent=1 // pred_fallthru
      _
    // Predicated region
    $region42: #{tpu_custom_call.1} parent=1 // pred_check
      _
    $region43: #{tpu_custom_call.1} parent=1 // pred_check_branch
      %592 = sbr.rel (0) target = $region45
    $region44: #{tpu_custom_call.1} parent=1 // pred_region
      %593 = dma.done [#allocation4], 128
    $region45: #{tpu_custom_call.1} parent=1 // pred_fallthru
      _
    %594 = vsyncpa [#allocation3], 1
    %595 = vsyncpa [#allocation6], 1
    %596 = vsyncpa [#allocation4], 1

</llo_original>
